<compile_context>
chip_gen: v7x
topology: tpu7x:2x2x1
jax: 0.10.0
libtpu: 0.0.40
codegen_flags: <defaults>
</compile_context>

<pallas_src>
import functools

import jax
import jax.numpy as jnp
from jax.experimental import pallas as pl
from jax.experimental.pallas import tpu as pltpu

_LANES = 128
_ACC_ROWS = 64                 # resident accumulator rows -> 8 independent add chains
_MAX_FALLBACK_LANES = 1024     # lane cap for the non-128-aligned trailing collapse
_MIN_SPLIT_ROWS = 1024         # don't split tiny inputs across TensorCores


def _cdiv(a, b):
    return -(-a // b)


def _round_up(x, m):
    return _cdiv(x, m) * m


@functools.lru_cache(maxsize=None)
def _num_tensorcores():
    """Best-effort TensorCore count of the local device (1 if unknown)."""
    try:
        info = pltpu.get_tpu_info()
        for attr in ("num_cores", "num_tensorcores", "core_count",
                     "num_cores_per_chip", "tensorcores_per_chip"):
            v = getattr(info, attr, None)
            if isinstance(v, int) and v >= 1:
                return int(v)
    except Exception:
        pass
    try:
        dev = jax.devices()[0]
        if dev.platform == "tpu":
            kind = str(getattr(dev, "device_kind", "")).lower()
            # v7x (2 TCs/chip) and megacore parts; v5e/v6e are single-core.
            if "v7" in kind or "7x" in kind or "v5p" in kind or kind.endswith("v4"):
                return 2
    except Exception:
        pass
    return 1


def _sq_err_sum_kernel(*refs, targets, block_rows, acc_rows, lanes,
                       total_rows, blocks_per_split, may_overhang):
    """Accumulate sum_j (x_j - target_j)^2 of this block into the resident
    (acc_rows, lanes) partial-sum accumulator (one accumulator per split)."""
    n_in = len(targets)
    in_refs = refs[:n_in]
    out_ref = refs[n_in]

    c = pl.program_id(0)   # split ("parallel"; one per TensorCore when > 1)
    i = pl.program_id(1)   # row-block within the split ("arbitrary")

    @pl.when(i == 0)
    def _init():
        out_ref[...] = jnp.zeros_like(out_ref)

    # Per-element squared errors of every input, summed elementwise.
    # Native-dtype tiles are widened to f32 here (cheap VPU cast, keeps the
    # HBM stream at the native width for bf16 inputs).
    sq = None
    for ref, tgt in zip(in_refs, targets):
        x = ref[...].astype(jnp.float32)
        d = x if tgt == 0.0 else x - tgt      # skip the sub for target == 0
        sq = d * d if sq is None else sq + d * d

    def _fold_into_acc(v):
        # (block_rows, lanes) -> (acc_rows, lanes): wide fold gives acc_rows/8
        # independent vreg add chains; no cross-lane XLU reduce, no narrow store.
        out_ref[...] += v.reshape(-1, acc_rows, lanes).sum(axis=0)

    if may_overhang:
        blk = c * blocks_per_split + i
        row0 = blk * block_rows
        is_full = row0 + block_rows <= total_rows

        @pl.when(is_full)
        def _full_block():       # hot path: no mask work at all
            _fold_into_acc(sq)

        @pl.when(jnp.logical_not(is_full))
        def _tail_block():       # cold path: at most one partial block / split
            rid = row0 + jax.lax.broadcasted_iota(
                jnp.int32, (block_rows, lanes), 0)
            _fold_into_acc(jnp.where(rid < total_rows, sq, 0.0))
    else:
        _fold_into_acc(sq)


def _lane_view_2d(x):
    """Zero-copy 2D view of x with a lane-dense last dim whenever possible."""
    n = x.size
    if n % _LANES == 0:
        return x.reshape(-1, _LANES)
    # Element count not a multiple of 128: collapse trailing dims of the
    # ORIGINAL shape (a free reshape) instead of materializing a padded HBM
    # copy.  The lane extent equals the full last dim of the view, which the
    # BlockSpec (8,128)-rule accepts; the ragged tail never touches HBM twice.
    lanes = 1
    for d in reversed(x.shape):
        d = int(d)
        if lanes > 1 and lanes * d > _MAX_FALLBACK_LANES:
            break
        lanes *= d
    lanes = max(lanes, 1)
    return x.reshape(-1, lanes)


def _sq_err_partial_sums(xs, targets):
    """f32 scalar: sum over all elements of sum_j (xs[j] - targets[j])^2."""
    targets = tuple(float(t) for t in targets)
    views = [_lane_view_2d(x) for x in xs]
    rows, lanes = views[0].shape
    assert all(v.shape == (rows, lanes) for v in views)
    if rows == 0 or lanes == 0:
        return jnp.zeros((), jnp.float32)

    n_cores = _num_tensorcores()
    num_splits = n_cores if (n_cores > 1 and rows >= _MIN_SPLIT_ROWS) else 1
    # ~1 MiB f32 blocks per input on multi-core parts (v7x: 64 MiB VMEM),
    # ~2 MiB on single-core v5e/v6e (amortizes per-grid-step overhead).
    max_block_rows = 2048 if n_cores > 1 else 4096

    if rows >= _ACC_ROWS:
        acc_rows = _ACC_ROWS
        blocks_per_split = _cdiv(_cdiv(rows, num_splits), max_block_rows)
        block_rows = _round_up(_cdiv(rows, num_splits * blocks_per_split),
                               _ACC_ROWS)
        if block_rows > rows:
            # A single block would be larger than the array: use a balanced
            # two-block split with a masked tail instead.
            block_rows = _round_up(_cdiv(rows, 2), _ACC_ROWS)
            blocks_per_split = _cdiv(_cdiv(rows, num_splits), block_rows)
        block_rows = min(block_rows, max_block_rows)
    else:
        # Tiny input: one full-extent block.
        acc_rows = next(a for a in (8, 4, 2, 1) if rows % a == 0)
        block_rows = rows
        blocks_per_split = 1

    nblocks_valid = _cdiv(rows, block_rows)
    may_overhang = (num_splits * blocks_per_split * block_rows) != rows

    def in_index_map(c, i):
        # The clamp keeps a (rare) fully out-of-range leftover block's DMA
        # legal; its compute is skipped by the in-kernel pl.when row gate.
        return (jnp.minimum(c * blocks_per_split + i, nblocks_valid - 1), 0)

    kernel = functools.partial(
        _sq_err_sum_kernel,
        targets=targets,
        block_rows=block_rows,
        acc_rows=acc_rows,
        lanes=lanes,
        total_rows=rows,
        blocks_per_split=blocks_per_split,
        may_overhang=may_overhang,
    )

    partials = pl.pallas_call(
        kernel,
        out_shape=jax.ShapeDtypeStruct((num_splits * acc_rows, lanes),
                                       jnp.float32),
        grid=(num_splits, blocks_per_split),
        in_specs=[pl.BlockSpec((block_rows, lanes), in_index_map)
                  for _ in views],
        out_specs=pl.BlockSpec((acc_rows, lanes), lambda c, i: (c, 0)),
        compiler_params=pltpu.CompilerParams(
            dimension_semantics=("parallel", "arbitrary"),
            vmem_limit_bytes=32 * 1024 * 1024),
    )(*views)

    # Final fold of the tiny (<= 128x128 f32) partial slab to a scalar.
    return jnp.sum(partials)


def lsgan_loss(d_real, d_fake, dis_or_gen=True):
    """Pallas equivalent of LSGANLoss.forward (returns an f32 scalar loss)."""
    if dis_or_gen:
        if d_real.shape == d_fake.shape:
            # Fused: one launch, one DMA pipeline for both streams; with equal
            # N, mean_real + mean_fake == (sum_real + sum_fake) / N.
            total = _sq_err_partial_sums((d_real, d_fake), (1.0, 0.0))
            return total / d_real.size
        # Fallback for mismatched shapes (the two means have different N).
        return (_sq_err_partial_sums((d_real,), (1.0,)) / d_real.size
                + _sq_err_partial_sums((d_fake,), (0.0,)) / d_fake.size)
    return _sq_err_partial_sums((d_fake,), (1.0,)) / d_fake.size


if __name__ == "__main__":
    key = jax.random.PRNGKey(0)
    k_real, k_fake, k_big_r, k_big_f, k_odd_r, k_odd_f = jax.random.split(key, 6)

    # Small discriminator-style NCHW outputs (module demo shape).
    d_real = jax.random.normal(k_real, (2, 4, 16, 16), dtype=jnp.float32)
    d_fake = jax.random.normal(k_fake, (2, 4, 16, 16), dtype=jnp.float32)

    loss_d = jax.block_until_ready(lsgan_loss(d_real, d_fake, dis_or_gen=True))
    loss_g = jax.block_until_ready(lsgan_loss(d_real, d_fake, dis_or_gen=False))

    ref_d = jnp.mean((d_real - 1.0) ** 2) + jnp.mean(d_fake ** 2)
    ref_g = jnp.mean((d_fake - 1.0) ** 2)
    assert jnp.allclose(loss_d, ref_d, rtol=1e-5, atol=1e-5), (loss_d, ref_d)
    assert jnp.allclose(loss_g, ref_g, rtol=1e-5, atol=1e-5), (loss_g, ref_g)

    # Larger input exercising multi-block streaming + the pl.when-gated ragged
    # tail block (2500 lane-rows -> uneven block coverage, masked tail).
    big_r = jax.random.normal(k_big_r, (2, 4, 200, 200), dtype=jnp.float32)
    big_f = jax.random.normal(k_big_f, (2, 4, 200, 200), dtype=jnp.float32)
    big_d = jax.block_until_ready(lsgan_loss(big_r, big_f, dis_or_gen=True))
    big_ref = jnp.mean((big_r - 1.0) ** 2) + jnp.mean(big_f ** 2)
    assert jnp.allclose(big_d, big_ref, rtol=1e-4, atol=1e-5), (big_d, big_ref)

    # Element count NOT a multiple of 128: no padded HBM copy, free trailing
    # reshape to (8, 900) and streamed as-is.
    odd_r = jax.random.normal(k_odd_r, (2, 4, 30, 30), dtype=jnp.float32)
    odd_f = jax.random.normal(k_odd_f, (2, 4, 30, 30), dtype=jnp.float32)
    odd_d = jax.block_until_ready(lsgan_loss(odd_r, odd_f, dis_or_gen=True))
    odd_ref = jnp.mean((odd_r - 1.0) ** 2) + jnp.mean(odd_f ** 2)
    assert jnp.allclose(odd_d, odd_ref, rtol=1e-4, atol=1e-5), (odd_d, odd_ref)

    # bf16 inputs: streamed in native dtype, widened to f32 inside the kernel.
    b_real = d_real.astype(jnp.bfloat16)
    b_fake = d_fake.astype(jnp.bfloat16)
    loss_bd = jax.block_until_ready(lsgan_loss(b_real, b_fake, dis_or_gen=True))
    ref_bd = (jnp.mean((b_real.astype(jnp.float32) - 1.0) ** 2)
              + jnp.mean(b_fake.astype(jnp.float32) ** 2))
    assert jnp.allclose(loss_bd, ref_bd, rtol=1e-4, atol=1e-5), (loss_bd, ref_bd)

    print("KERNEL_OK")
</pallas_src>

<mosaic_0001>
module attributes {stable_mosaic.version = 11 : i64} {
  func.func @_sq_err_sum_kernel(%arg0: i32, %arg1: i32, %arg2: memref<16x128xf32, #tpu.memory_space<vmem>>, %arg3: memref<16x128xf32, #tpu.memory_space<vmem>>, %arg4: memref<8x128xf32, #tpu.memory_space<vmem>>) attributes {dimension_semantics = [#tpu.dimension_semantics<parallel>, #tpu.dimension_semantics<arbitrary>], iteration_bounds = array<i64: 1, 1>, scalar_prefetch = 0 : i64, scratch_operands = 0 : i64, tpu.core_type = #tpu.core_type<tc>, window_params = [{transform_indices = @transform_0, window_bounds = array<i64: 16, 128>}, {transform_indices = @transform_1, window_bounds = array<i64: 16, 128>}, {transform_indices = @transform_2, window_bounds = array<i64: 8, 128>}]} {
    %c0_i32 = arith.constant 0 : i32
    %0 = arith.cmpi eq, %arg1, %c0_i32 : i32
    %1 = arith.extui %0 : i1 to i32
    %c0_i32_0 = arith.constant 0 : i32
    %2 = arith.cmpi ne, %1, %c0_i32_0 : i32
    scf.if %2 {
      %cst_9 = arith.constant 0.000000e+00 : f32
      %15 = vector.broadcast %cst_9 : f32 to vector<8x128xf32>
      %c0_10 = arith.constant 0 : index
      %c0_11 = arith.constant 0 : index
      %16 = vector.load %arg4[%c0_10, %c0_11] : memref<8x128xf32, #tpu.memory_space<vmem>>, vector<8x128xf32>
      tpu.vector_store %arg4[%c0_10, %c0_11], %15 {strides = array<i32>} : memref<8x128xf32, #tpu.memory_space<vmem>>, vector<8x128xf32>,
    } else {
    }
    %c0 = arith.constant 0 : index
    %c0_1 = arith.constant 0 : index
    %3 = vector.load %arg2[%c0, %c0_1] : memref<16x128xf32, #tpu.memory_space<vmem>>, vector<16x128xf32>
    %cst = arith.constant 1.000000e+00 : f32
    %4 = vector.broadcast %cst : f32 to vector<16x128xf32>
    %5 = arith.subf %3, %4 : vector<16x128xf32>
    %6 = arith.mulf %5, %5 : vector<16x128xf32>
    %c0_2 = arith.constant 0 : index
    %c0_3 = arith.constant 0 : index
    %7 = vector.load %arg3[%c0_2, %c0_3] : memref<16x128xf32, #tpu.memory_space<vmem>>, vector<16x128xf32>
    %8 = arith.mulf %7, %7 : vector<16x128xf32>
    %9 = arith.addf %6, %8 : vector<16x128xf32>
    %c0_4 = arith.constant 0 : index
    %c0_5 = arith.constant 0 : index
    %10 = vector.load %arg4[%c0_4, %c0_5] : memref<8x128xf32, #tpu.memory_space<vmem>>, vector<8x128xf32>
    %11 = vector.shape_cast %9 : vector<16x128xf32> to vector<2x8x128xf32>
    %cst_6 = arith.constant dense<0.000000e+00> : vector<8x128xf32>
    %12 = vector.multi_reduction <add>, %11, %cst_6 [0] : vector<2x8x128xf32> to vector<8x128xf32>
    %13 = arith.addf %10, %12 : vector<8x128xf32>
    %c0_7 = arith.constant 0 : index
    %c0_8 = arith.constant 0 : index
    %14 = vector.load %arg4[%c0_7, %c0_8] : memref<8x128xf32, #tpu.memory_space<vmem>>, vector<8x128xf32>
    tpu.vector_store %arg4[%c0_7, %c0_8], %13 {strides = array<i32>} : memref<8x128xf32, #tpu.memory_space<vmem>>, vector<8x128xf32>,
    return
  }
  func.func @transform_0(%arg0: i32, %arg1: i32) -> (i32, i32) {
    %c1_i32 = arith.constant 1 : i32
    %0 = arith.muli %arg0, %c1_i32 : i32
    %1 = arith.addi %0, %arg1 : i32
    %c0_i32 = arith.constant 0 : i32
    %2 = arith.minsi %1, %c0_i32 : i32
    %c0_i32_0 = arith.constant 0 : i32
    %c0_i32_1 = arith.constant 0 : i32
    return %2, %c0_i32_0 : i32, i32
  }
  func.func @transform_1(%arg0: i32, %arg1: i32) -> (i32, i32) {
    %c1_i32 = arith.constant 1 : i32
    %0 = arith.muli %arg0, %c1_i32 : i32
    %1 = arith.addi %0, %arg1 : i32
    %c0_i32 = arith.constant 0 : i32
    %2 = arith.minsi %1, %c0_i32 : i32
    %c0_i32_0 = arith.constant 0 : i32
    %c0_i32_1 = arith.constant 0 : i32
    return %2, %c0_i32_0 : i32, i32
  }
  func.func @transform_2(%arg0: i32, %arg1: i32) -> (i32, i32) {
    %c0_i32 = arith.constant 0 : i32
    %c0_i32_0 = arith.constant 0 : i32
    return %arg0, %c0_i32 : i32, i32
  }
}

</mosaic_0001>

<llo_original>
// kernel: tpu_custom_call.1
$region0: #{tpu_custom_call.1}
  #allocation0 [shape = 'u32[]', space=smem, size = 0x4, offset = 0x4, fixed_abs, tag = 'smem constant byte address 0x4 - core index']
  #allocation1 [shape = 'u32[144,128]{1,0:T(1,128)}', space=vmem, size = 0x12000, scoped, tag = 'internal scratch']
  %s0 = inlined_call_operand.hbm [shape: f32[16,128], index: 0, kind: input, shape index: {}]
  %s1 = inlined_call_operand.hbm [shape: f32[16,128], index: 1, kind: input, shape index: {}]
  %s2 = inlined_call_operand.hbm [shape: f32[8,128], index: 2, kind: output, shape index: {}]
  %s3 = sld [smem:[#allocation0]]
  $region30: #{tpu_custom_call.1} parent=0
    _
  %s5 = ssub.s32 1, %s3
  %s6 = scalar_select 0, %s5, %s3
  $region1: #{tpu_custom_call.1} parent=0
    #allocation2 [shape = 'u8[8192]{0}', space=vmem, size = 0x2000, scoped, tag = 'input window, operand 0, single buffered']
    #allocation3 [shape = 's32[1]{0}', space=sflag, size = 0x4, scoped, tag = 'scoped memory for tpu_custom_call.1']
    #allocation4 [shape = 's32[1]{0}', space=sflag, size = 0x4, scoped, tag = 'scoped memory for tpu_custom_call.1']
    #allocation5 [shape = 'u8[8192]{0}', space=vmem, size = 0x2000, scoped, tag = 'input window, operand 1, single buffered']
    #allocation6 [shape = 's32[1]{0}', space=sflag, size = 0x4, scoped, tag = 'scoped memory for tpu_custom_call.1']
    #allocation7 [shape = 'u8[4096]{0}', space=vmem, size = 0x1000, scoped, tag = 'output window, operand 0, single buffered']
    %7 = vsyncpa [#allocation3], 0
    %8 = vsyncpa [#allocation6], 0
    %9 = vsyncpa [#allocation4], 0
    // Predicated region
    $region2: #{tpu_custom_call.1} parent=1 // pred_check
      _
    $region3: #{tpu_custom_call.1} parent=1 // pred_check_branch
      %11 = sbr.rel (0) target = $region5
    $region4: #{tpu_custom_call.1} parent=1 // pred_region
      %s12 = sadd.s32 0, 0
      %p13 = scmp.lt.s32.totalorder %s12, 0
      %s14 = scalar_select %p13, %s12, 0
      %s15 = smul.u32 2, %s14
      %s17 = ssub.s32 256, 256
      %18 = vsyncadd [#allocation3], %s17
      %s19 = smul.addr %s15, 128
      %s20 = scalar_lea.hbm %s0, %s19
      %s21 = sshll.u32 [#allocation2], 4
      %s22 = int_to_ptr.vmem [resolvable:$true] %s21
      %27 = dma.hbm_to_vmem [thread:$0]  %s20, 256, %s22, [#allocation3], 128, 128, 8
    $region5: #{tpu_custom_call.1} parent=1 // pred_fallthru
      _
    // Predicated region
    $region6: #{tpu_custom_call.1} parent=1 // pred_check
      _
    $region7: #{tpu_custom_call.1} parent=1 // pred_check_branch
      %29 = sbr.rel (0) target = $region9
    $region8: #{tpu_custom_call.1} parent=1 // pred_region
      %s30 = sadd.s32 0, 0
      %p31 = scmp.lt.s32.totalorder %s30, 0
      %s32 = scalar_select %p31, %s30, 0
      %s33 = smul.u32 2, %s32
      %s35 = ssub.s32 256, 256
      %36 = vsyncadd [#allocation6], %s35
      %s37 = smul.addr %s33, 128
      %s38 = scalar_lea.hbm %s1, %s37
      %s39 = sshll.u32 [#allocation5], 4
      %s40 = int_to_ptr.vmem [resolvable:$true] %s39
      %45 = dma.hbm_to_vmem [thread:$0]  %s38, 256, %s40, [#allocation6], 128, 128, 8
    $region9: #{tpu_custom_call.1} parent=1 // pred_fallthru
      _
    // Predicated region
    $region10: #{tpu_custom_call.1} parent=1 // pred_check
      _
    $region11: #{tpu_custom_call.1} parent=1 // pred_check_branch
      %47 = sbr.rel (0) target = $region13
    $region12: #{tpu_custom_call.1} parent=1 // pred_region
      %48 = dma.done [#allocation3], 256
    $region13: #{tpu_custom_call.1} parent=1 // pred_fallthru
      _
    // Predicated region
    $region14: #{tpu_custom_call.1} parent=1 // pred_check
      _
    $region15: #{tpu_custom_call.1} parent=1 // pred_check_branch
      %50 = sbr.rel (0) target = $region17
    $region16: #{tpu_custom_call.1} parent=1 // pred_region
      %51 = dma.done [#allocation6], 256
    $region17: #{tpu_custom_call.1} parent=1 // pred_fallthru
      _
    %s52 = sadd.s32 0, 0
    %p53 = scmp.lt.s32.totalorder %s52, 0
    %s54 = scalar_select %p53, %s52, 0
    %s55 = smul.u32 2, %s54
    %s56 = sadd.s32 0, 0
    %p57 = scmp.lt.s32.totalorder %s56, 0
    %s58 = scalar_select %p57, %s56, 0
    %s59 = smul.u32 2, %s58
    %p60 = scmp.eq.s32.totalorder 0, 0
    // Predicated region
    $region18: #{tpu_custom_call.1} parent=1 // pred_check
      %p61 = pneg %p60
    $region19: #{tpu_custom_call.1} parent=1 // pred_check_branch
      %63 = sbr.rel (%p61) target = $region21
    $region20: #{tpu_custom_call.1} parent=1 // pred_region
      %64 = vst [vmem:[#allocation7] sm:$0xff] 0.0
    $region21: #{tpu_custom_call.1} parent=1 // pred_fallthru
      _
    %v65 = vld [vmem:[#allocation2] sm:$0xff]
    %v66 = vld [vmem:[#allocation2 + $0x8] sm:$0xff]
    %v67 = vsub.f32 %v65, 1.0
    %v68 = vsub.f32 %v66, 1.0
    %v69 = vmul.f32 %v67, %v67
    %v70 = vmul.f32 %v68, %v68
    %v71 = vld [vmem:[#allocation5] sm:$0xff]
    %v72 = vld [vmem:[#allocation5 + $0x8] sm:$0xff]
    %v73 = vmul.f32 %v71, %v71
    %v74 = vmul.f32 %v72, %v72
    %v75 = vadd.f32 %v69, %v73
    %v76 = vadd.f32 %v70, %v74
    %v77 = vld [vmem:[#allocation7] sm:$0xff]
    %v78 = vadd.f32 %v75, %v76
    %v79 = vadd.f32 %v77, %v78
    %80 = vst [vmem:[#allocation7] sm:$0xff] %v79
    // Predicated region
    $region22: #{tpu_custom_call.1} parent=1 // pred_check
      _
    $region23: #{tpu_custom_call.1} parent=1 // pred_check_branch
      %82 = sbr.rel (0) target = $region25
    $region24: #{tpu_custom_call.1} parent=1 // pred_region
      %s84 = ssub.s32 128, 128
      %85 = vsyncadd [#allocation4], %s84
      %s87 = sshll.u32 [#allocation7], 4
      %s88 = int_to_ptr.vmem [resolvable:$true] %s87
      %90 = dma.vmem_to_hbm [thread:$0]  %s88, 128, %s2, [#allocation4]
    $region25: #{tpu_custom_call.1} parent=1 // pred_fallthru
      _
    // Predicated region
    $region26: #{tpu_custom_call.1} parent=1 // pred_check
      _
    $region27: #{tpu_custom_call.1} parent=1 // pred_check_branch
      %92 = sbr.rel (0) target = $region29
    $region28: #{tpu_custom_call.1} parent=1 // pred_region
      %93 = dma.done [#allocation4], 128
    $region29: #{tpu_custom_call.1} parent=1 // pred_fallthru
      _
    %94 = vsyncpa [#allocation3], 1
    %95 = vsyncpa [#allocation6], 1
    %96 = vsyncpa [#allocation4], 1

</llo_original>
